<compile_context>
chip_gen: v7x
topology: tpu7x:2x2x1
jax: 0.10.0
libtpu: 0.0.40
codegen_flags: <defaults>
</compile_context>

<pallas_src>
import jax
import jax.numpy as jnp
from jax.experimental import pallas as pl
from jax.experimental.pallas import tpu as pltpu


def _logsigmoid(x):
    # numerically stable log(sigmoid(x)) = min(x, 0) - log1p(exp(-|x|))
    return jnp.minimum(x, 0.0) - jnp.log1p(jnp.exp(-jnp.abs(x)))


def _round_up(x, m):
    return (x + m - 1) // m * m


def _make_kernel(n_pos, true_batch, tile_b):
    """Kernel over one batch tile: (TB, H) center rows + (TB, K, H) context rows."""

    def kernel(in_ref, ctx_ref, out_ref, acc_ref):
        t = pl.program_id(0)

        @pl.when(t == 0)
        def _init():
            acc_ref[0] = jnp.float32(0.0)

        in_e = in_ref[...].astype(jnp.float32)    # (TB, H)
        ctx_e = ctx_ref[...].astype(jnp.float32)  # (TB, K, H), K = P + N

        # single broadcast of the center embedding, single multiply, single
        # cross-lane reduce over H for pos and neg together.
        dots = jnp.sum(ctx_e * in_e[:, None, :], axis=-1)          # (TB, K)

        # first n_pos columns are positive samples, the rest are negatives
        col = jax.lax.broadcasted_iota(jnp.int32, dots.shape, 1)
        signed = jnp.where(col < n_pos, dots, -dots)
        ls = _logsigmoid(signed)                                    # (TB, K)

        # mask out batch-padding rows so the mean denominator stays B*P
        row = jax.lax.broadcasted_iota(jnp.int32, ls.shape, 0) + t * tile_b
        ls = jnp.where(row < true_batch, ls, 0.0)

        acc_ref[0] += jnp.sum(ls)

        @pl.when(t == pl.num_programs(0) - 1)
        def _finalize():
            out_ref[0, 0] = acc_ref[0] * jnp.float32(-1.0 / (true_batch * n_pos))

    return kernel


def skipgram_loss(in_embedding, out_embedding, in_ids, pos_ids, neg_ids,
                  *, tile_rows=None):
    """Forward pass of SkipGram. Returns scalar loss (float32)."""
    B = in_ids.shape[0]
    P = pos_ids.shape[1]
    N = neg_ids.shape[1]
    if P != N:
        raise ValueError("SkipGram requires P == N (elementwise add of log_pos+log_neg)")
    H = in_embedding.shape[1]
    K = P + N

    # One combined gather for pos + neg context rows (gathers stay in XLA;
    # see TODO at top of file).
    ctx_ids = jnp.concatenate([pos_ids, neg_ids], axis=1)           # (B, K)
    in_embed = jnp.take(in_embedding, in_ids, axis=0)               # (B, H)
    ctx_embed = jnp.take(out_embedding, ctx_ids, axis=0)            # (B, K, H)

    # ---- batch tile sizing (fits double-buffered in scoped VMEM on all gens) ----
    if tile_rows is None:
        row_bytes = (K + 1) * H * 4
        budget = 8 * 1024 * 1024
        tile_rows = max(8, min(1024, (budget // row_bytes) // 8 * 8))
    tile_rows = int(max(8, min(_round_up(tile_rows, 8), _round_up(B, 8))))

    B_pad = _round_up(B, tile_rows)
    if B_pad != B:
        in_embed = jnp.pad(in_embed, ((0, B_pad - B), (0, 0)))
        ctx_embed = jnp.pad(ctx_embed, ((0, B_pad - B), (0, 0), (0, 0)))
    grid = (B_pad // tile_rows,)

    kernel = _make_kernel(P, B, tile_rows)

    cost = pl.CostEstimate(
        flops=2 * B * K * H + 6 * B * K,
        transcendentals=2 * B * K,                       # exp + log1p per dot
        bytes_accessed=(B_pad * K * H + B_pad * H) * in_embed.dtype.itemsize + 4,
    )

    out = pl.pallas_call(
        kernel,
        out_shape=jax.ShapeDtypeStruct((1, 1), jnp.float32),
        grid=grid,
        in_specs=[
            pl.BlockSpec((tile_rows, H), lambda t: (t, 0)),
            pl.BlockSpec((tile_rows, K, H), lambda t: (t, 0, 0)),
        ],
        out_specs=pl.BlockSpec((1, 1), lambda t: (0, 0),
                               memory_space=pltpu.MemorySpace.SMEM),
        scratch_shapes=[pltpu.SMEM((1,), jnp.float32)],
        compiler_params=pltpu.CompilerParams(
            # batch axis carries the scalar accumulator -> "arbitrary"
            dimension_semantics=("arbitrary",),
            vmem_limit_bytes=32 * 1024 * 1024,
        ),
        cost_estimate=cost,
    )(in_embed, ctx_embed)
    return out[0, 0]


def skipgram_loss_ref(in_embedding, out_embedding, in_ids, pos_ids, neg_ids):
    """Pure-JAX reference for correctness check."""
    in_embed = in_embedding[in_ids]             # (B, H)
    pos_embed = out_embedding[pos_ids]          # (B, P, H)
    neg_embed = out_embedding[neg_ids]          # (B, N, H)
    pos_dot = jnp.einsum("bph,bh->bp", pos_embed, in_embed)
    neg_dot = -jnp.einsum("bnh,bh->bn", neg_embed, in_embed)
    return -jnp.mean(_logsigmoid(pos_dot) + _logsigmoid(neg_dot))


if __name__ == "__main__":
    vocab_size = 50
    hidden_size = 32
    batch = 2
    n_pos = 8
    n_neg = 8  # must equal n_pos (original module adds (B,P)+(B,N))

    key = jax.random.PRNGKey(0)
    k_in, k_out, k_c, k_p, k_n = jax.random.split(key, 5)

    # nn.Embedding default init: N(0, 1)
    in_embedding = jax.random.normal(k_in, (vocab_size, hidden_size), jnp.float32)
    out_embedding = jax.random.normal(k_out, (vocab_size, hidden_size), jnp.float32)

    in_ids = jax.random.randint(k_c, (batch,), 0, vocab_size, jnp.int32)
    pos_ids = jax.random.randint(k_p, (batch, n_pos), 0, vocab_size, jnp.int32)
    neg_ids = jax.random.randint(k_n, (batch, n_neg), 0, vocab_size, jnp.int32)

    fn = jax.jit(skipgram_loss, static_argnames=("tile_rows",))

    loss = jax.block_until_ready(
        fn(in_embedding, out_embedding, in_ids, pos_ids, neg_ids))
    ref = skipgram_loss_ref(in_embedding, out_embedding, in_ids, pos_ids, neg_ids)
    assert jnp.allclose(loss, ref, atol=1e-5, rtol=1e-5), (loss, ref)

    # Second config: exercises the multi-tile grid accumulation and the
    # padded-row masking (batch not a multiple of the tile).
    b2, p2 = 20, 4
    k_c2, k_p2, k_n2 = jax.random.split(jax.random.PRNGKey(1), 3)
    in_ids2 = jax.random.randint(k_c2, (b2,), 0, vocab_size, jnp.int32)
    pos_ids2 = jax.random.randint(k_p2, (b2, p2), 0, vocab_size, jnp.int32)
    neg_ids2 = jax.random.randint(k_n2, (b2, p2), 0, vocab_size, jnp.int32)
    loss2 = jax.block_until_ready(
        fn(in_embedding, out_embedding, in_ids2, pos_ids2, neg_ids2, tile_rows=8))
    ref2 = skipgram_loss_ref(in_embedding, out_embedding, in_ids2, pos_ids2, neg_ids2)
    assert jnp.allclose(loss2, ref2, atol=1e-5, rtol=1e-5), (loss2, ref2)

    print("KERNEL_OK")
</pallas_src>

<mosaic_0001>
module attributes {stable_mosaic.version = 11 : i64} {
  func.func @kernel(%arg0: i32, %arg1: memref<8x32xf32, #tpu.memory_space<vmem>>, %arg2: memref<8x16x32xf32, #tpu.memory_space<vmem>>, %arg3: memref<1x1xf32, #tpu.memory_space<smem>>, %arg4: memref<1xf32, #tpu.memory_space<smem>>) attributes {dimension_semantics = [#tpu.dimension_semantics<arbitrary>], iteration_bounds = array<i64: 1>, scalar_prefetch = 0 : i64, scratch_operands = 1 : i64, tpu.core_type = #tpu.core_type<tc>, window_params = [{transform_indices = @transform_0, window_bounds = array<i64: 8, 32>}, {transform_indices = @transform_1, window_bounds = array<i64: 8, 16, 32>}, {transform_indices = @transform_2, window_bounds = array<i64: 1, 1>}]} {
    %c0_i32 = arith.constant 0 : i32
    %0 = arith.cmpi eq, %arg0, %c0_i32 : i32
    %1 = arith.extui %0 : i1 to i32
    %c0_i32_0 = arith.constant 0 : i32
    %2 = arith.cmpi ne, %1, %c0_i32_0 : i32
    scf.if %2 {
      %cst_15 = arith.constant 0.000000e+00 : f32
      %c0_16 = arith.constant 0 : index
      %41 = memref.load %arg4[%c0_16] : memref<1xf32, #tpu.memory_space<smem>>
      memref.store %cst_15, %arg4[%c0_16] : memref<1xf32, #tpu.memory_space<smem>>
    } else {
    }
    %c0 = arith.constant 0 : index
    %c0_1 = arith.constant 0 : index
    %3 = vector.load %arg1[%c0, %c0_1] : memref<8x32xf32, #tpu.memory_space<vmem>>, vector<8x32xf32>
    %c0_2 = arith.constant 0 : index
    %c0_3 = arith.constant 0 : index
    %c0_4 = arith.constant 0 : index
    %4 = vector.load %arg2[%c0_2, %c0_3, %c0_4] : memref<8x16x32xf32, #tpu.memory_space<vmem>>, vector<8x16x32xf32>
    %5 = vector.shape_cast %3 : vector<8x32xf32> to vector<8x1x32xf32>
    %6 = vector.broadcast %5 : vector<8x1x32xf32> to vector<8x16x32xf32>
    %7 = arith.mulf %4, %6 : vector<8x16x32xf32>
    %cst = arith.constant dense<0.000000e+00> : vector<8x16xf32>
    %8 = vector.multi_reduction <add>, %7, %cst [2] : vector<8x16x32xf32> to vector<8x16xf32>
    %9 = tpu.iota {dimensions = array<i32: 1>} : vector<8x16xi32>
    %c8_i32 = arith.constant 8 : i32
    %10 = vector.broadcast %c8_i32 : i32 to vector<8x16xi32>
    %11 = arith.cmpi slt, %9, %10 : vector<8x16xi32>
    %cst_5 = arith.constant 0.000000e+00 : f32
    %12 = vector.broadcast %cst_5 : f32 to vector<8x16xf32>
    %13 = arith.subf %12, %8 : vector<8x16xf32>
    %14 = arith.select %11, %8, %13 : vector<8x16xi1>, vector<8x16xf32>
    %cst_6 = arith.constant 0.000000e+00 : f32
    %15 = vector.broadcast %cst_6 : f32 to vector<8x16xf32>
    %16 = arith.minimumf %14, %15 : vector<8x16xf32>
    %17 = math.absf %14 : vector<8x16xf32>
    %cst_7 = arith.constant 0.000000e+00 : f32
    %18 = vector.broadcast %cst_7 : f32 to vector<8x16xf32>
    %19 = arith.subf %18, %17 : vector<8x16xf32>
    %20 = math.exp %19 : vector<8x16xf32>
    %21 = math.log1p %20 : vector<8x16xf32>
    %22 = arith.subf %16, %21 : vector<8x16xf32>
    %23 = tpu.iota {dimensions = array<i32: 0>} : vector<8x16xi32>
    %c8_i32_8 = arith.constant 8 : i32
    %24 = arith.muli %arg0, %c8_i32_8 : i32
    %25 = vector.broadcast %24 : i32 to vector<8x16xi32>
    %26 = arith.addi %23, %25 : vector<8x16xi32>
    %c2_i32 = arith.constant 2 : i32
    %27 = vector.broadcast %c2_i32 : i32 to vector<8x16xi32>
    %28 = arith.cmpi slt, %26, %27 : vector<8x16xi32>
    %cst_9 = arith.constant 0.000000e+00 : f32
    %29 = vector.broadcast %cst_9 : f32 to vector<8x16xf32>
    %30 = arith.select %28, %22, %29 : vector<8x16xi1>, vector<8x16xf32>
    %c0_10 = arith.constant 0 : index
    %31 = memref.load %arg4[%c0_10] : memref<1xf32, #tpu.memory_space<smem>>
    %32 = vector.shape_cast %30 : vector<8x16xf32> to vector<1x8x16xf32>
    %cst_11 = arith.constant dense<0.000000e+00> : vector<1xf32>
    %33 = vector.multi_reduction <add>, %32, %cst_11 [1, 2] : vector<1x8x16xf32> to vector<1xf32>
    %34 = vector.shape_cast %33 : vector<1xf32> to vector<1x1x1xf32>
    %35 = vector.extract %34[0, 0, 0] : f32 from vector<1x1x1xf32>
    %36 = arith.addf %31, %35 : f32
    %c0_12 = arith.constant 0 : index
    %37 = memref.load %arg4[%c0_12] : memref<1xf32, #tpu.memory_space<smem>>
    memref.store %36, %arg4[%c0_12] : memref<1xf32, #tpu.memory_space<smem>>
    %c0_i32_13 = arith.constant 0 : i32
    %38 = arith.cmpi eq, %arg0, %c0_i32_13 : i32
    %39 = arith.extui %38 : i1 to i32
    %c0_i32_14 = arith.constant 0 : i32
    %40 = arith.cmpi ne, %39, %c0_i32_14 : i32
    scf.if %40 {
      %c0_15 = arith.constant 0 : index
      %41 = memref.load %arg4[%c0_15] : memref<1xf32, #tpu.memory_space<smem>>
      %cst_16 = arith.constant -6.250000e-02 : f32
      %42 = arith.mulf %41, %cst_16 : f32
      %c0_17 = arith.constant 0 : index
      %c0_18 = arith.constant 0 : index
      %43 = memref.load %arg3[%c0_17, %c0_18] : memref<1x1xf32, #tpu.memory_space<smem>>
      memref.store %42, %arg3[%c0_17, %c0_18] : memref<1x1xf32, #tpu.memory_space<smem>>
    } else {
    }
    return
  }
  func.func @transform_0(%arg0: i32) -> (i32, i32) {
    %c0_i32 = arith.constant 0 : i32
    %c0_i32_0 = arith.constant 0 : i32
    return %arg0, %c0_i32 : i32, i32
  }
  func.func @transform_1(%arg0: i32) -> (i32, i32, i32) {
    %c0_i32 = arith.constant 0 : i32
    %c0_i32_0 = arith.constant 0 : i32
    %c0_i32_1 = arith.constant 0 : i32
    return %arg0, %c0_i32, %c0_i32_0 : i32, i32, i32
  }
  func.func @transform_2(%arg0: i32) -> (i32, i32) {
    %c0_i32 = arith.constant 0 : i32
    %c0_i32_0 = arith.constant 0 : i32
    %c0_i32_1 = arith.constant 0 : i32
    return %c0_i32, %c0_i32_0 : i32, i32
  }
}

</mosaic_0001>

<llo_original>
// kernel: skipgram_loss.1
$region0: #{skipgram_loss.1}
  #allocation0 [shape = 'u32[]', space=smem, size = 0x4, offset = 0x4, fixed_abs, tag = 'smem constant byte address 0x4 - core index']
  #allocation1 [shape = 'u32[144,128]{1,0:T(1,128)}', space=vmem, size = 0x12000, scoped, tag = 'internal scratch']
  #allocation2 [shape = 'f32[1]{0:T(128)}', space=smem, size = 0x200, scoped, tag = 'scratch operand']
  %s0 = inlined_call_operand.vmem [shape: f32[8,32], index: 0, kind: input, shape index: {}]
  %s1 = inlined_call_operand.vmem [shape: f32[8,16,32], index: 1, kind: input, shape index: {}]
  %s2 = inlined_call_operand.hbm [shape: f32[1,1], index: 2, kind: output, shape index: {}]
  %s3 = sld [smem:[#allocation0]]
  $region26: #{skipgram_loss.1} parent=0
    _
  %s5 = ssub.s32 1, %s3
  %s6 = scalar_select 0, %s5, %s3
  $region1: #{skipgram_loss.1} parent=0
    #allocation3 [shape = 'u8[512]{0}', space=smem, size = 0x200, scoped, tag = 'output window, operand 0, single buffered']
    #allocation4 [shape = 's32[1]{0}', space=sflag, size = 0x4, scoped, tag = 'scoped memory for skipgram_loss.1']
    %7 = vsyncpa [#allocation4], 0
    // Predicated region
    $region2: #{skipgram_loss.1} parent=1 // pred_check
      _
    $region3: #{skipgram_loss.1} parent=1 // pred_check_branch
      %9 = sbr.rel (0) target = $region5
    $region4: #{skipgram_loss.1} parent=1 // pred_region
      _
    $region5: #{skipgram_loss.1} parent=1 // pred_fallthru
      _
    // Predicated region
    $region6: #{skipgram_loss.1} parent=1 // pred_check
      _
    $region7: #{skipgram_loss.1} parent=1 // pred_check_branch
      %11 = sbr.rel (0) target = $region9
    $region8: #{skipgram_loss.1} parent=1 // pred_region
      _
    $region9: #{skipgram_loss.1} parent=1 // pred_fallthru
      _
    %p12 = scmp.eq.s32.totalorder 0, 0
    // Predicated region
    $region10: #{skipgram_loss.1} parent=1 // pred_check
      %p13 = pneg %p12
    $region11: #{skipgram_loss.1} parent=1 // pred_check_branch
      %15 = sbr.rel (%p13) target = $region13
    $region12: #{skipgram_loss.1} parent=1 // pred_region
      %s16 = scalar_lea.smem [#allocation2], 0
      %17 = sst [smem:[%s16]] 0.0
    $region13: #{skipgram_loss.1} parent=1 // pred_fallthru
      _
    %v18 = vld [vmem:[%s0] sm:$0xff]
    %v19 = vld [vmem:[%s1] sm:$0xff]
    %v20 = vld [vmem:[%s1 + $0x8] sm:$0xff]
    %v21 = vld [vmem:[%s1 + $0x10] sm:$0xff]
    %v22 = vld [vmem:[%s1 + $0x18] sm:$0xff]
    %v23 = vld [vmem:[%s1 + $0x20] sm:$0xff]
    %v24 = vld [vmem:[%s1 + $0x28] sm:$0xff]
    %v25 = vld [vmem:[%s1 + $0x30] sm:$0xff]
    %v26 = vld [vmem:[%s1 + $0x38] sm:$0xff]
    %v27 = vld [vmem:[%s1 + $0x40] sm:$0xff]
    %v28 = vld [vmem:[%s1 + $0x48] sm:$0xff]
    %v29 = vld [vmem:[%s1 + $0x50] sm:$0xff]
    %v30 = vld [vmem:[%s1 + $0x58] sm:$0xff]
    %v31 = vld [vmem:[%s1 + $0x60] sm:$0xff]
    %v32 = vld [vmem:[%s1 + $0x68] sm:$0xff]
    %v33 = vld [vmem:[%s1 + $0x70] sm:$0xff]
    %v34 = vld [vmem:[%s1 + $0x78] sm:$0xff]
    %v36 = vcombine.high %v18, %v18
    %v38 = vunpack.c.l.s4 1966171168
    %v39 = vunpack.c.0.s8 %v38
    %v40 = vlaneseq
    %v41 = vshrl.u32 %v40, 7
    %v42 = vsub.s32 %v39, %v41
    %v43 = vrot.slane %v18, %v42
    %v45 = vunpack.c.l.s4 1966171168
    %v46 = vunpack.c.0.s8 %v45
    %v47 = vlaneseq
    %v48 = vshrl.u32 %v47, 7
    %v49 = vsub.s32 %v46, %v48
    %v50 = vrot.slane %v36, %v49
    %v51 = vcombine.high %v43, %v43
    %v52 = vcombine.high %v50, %v50
    %v54 = vunpack.c.l.s4 1966171168
    %v55 = vunpack.c.0.s8 %v54
    %v56 = vlaneseq
    %v57 = vshrl.u32 %v56, 7
    %v58 = vsub.s32 %v55, %v57
    %v59 = vrot.slane %v43, %v58
    %v61 = vunpack.c.l.s4 1966171168
    %v62 = vunpack.c.0.s8 %v61
    %v63 = vlaneseq
    %v64 = vshrl.u32 %v63, 7
    %v65 = vsub.s32 %v62, %v64
    %v66 = vrot.slane %v50, %v65
    %v68 = vunpack.c.l.s4 1966171168
    %v69 = vunpack.c.0.s8 %v68
    %v70 = vlaneseq
    %v71 = vshrl.u32 %v70, 7
    %v72 = vsub.s32 %v69, %v71
    %v73 = vrot.slane %v51, %v72
    %v75 = vunpack.c.l.s4 1966171168
    %v76 = vunpack.c.0.s8 %v75
    %v77 = vlaneseq
    %v78 = vshrl.u32 %v77, 7
    %v79 = vsub.s32 %v76, %v78
    %v80 = vrot.slane %v52, %v79
    %v81 = vcombine.high %v59, %v59
    %v82 = vcombine.high %v66, %v66
    %v83 = vcombine.high %v73, %v73
    %v84 = vcombine.high %v80, %v80
    %v85 = vlaneseq
    %v86 = vshrl.u32 %v85, 7
    %v87 = vsub.s32 0, %v86
    %v88 = vrot.slane %v59, %v87
    %v89 = vlaneseq
    %v90 = vshrl.u32 %v89, 7
    %v91 = vsub.s32 0, %v90
    %v92 = vrot.slane %v73, %v91
    %v93 = vlaneseq
    %v94 = vshrl.u32 %v93, 7
    %v95 = vsub.s32 0, %v94
    %v96 = vrot.slane %v81, %v95
    %v97 = vlaneseq
    %v98 = vshrl.u32 %v97, 7
    %v99 = vsub.s32 0, %v98
    %v100 = vrot.slane %v83, %v99
    %v101 = vlaneseq
    %v102 = vshrl.u32 %v101, 7
    %v103 = vsub.s32 0, %v102
    %v104 = vrot.slane %v66, %v103
    %v105 = vlaneseq
    %v106 = vshrl.u32 %v105, 7
    %v107 = vsub.s32 0, %v106
    %v108 = vrot.slane %v80, %v107
    %v109 = vlaneseq
    %v110 = vshrl.u32 %v109, 7
    %v111 = vsub.s32 0, %v110
    %v112 = vrot.slane %v82, %v111
    %v113 = vlaneseq
    %v114 = vshrl.u32 %v113, 7
    %v115 = vsub.s32 0, %v114
    %v116 = vrot.slane %v84, %v115
    %v125 = vmul.f32 %v19, %v88
    %v126 = vmul.f32 %v20, %v88
    %v127 = vmul.f32 %v21, %v92
    %v128 = vmul.f32 %v22, %v92
    %v129 = vmul.f32 %v23, %v96
    %v130 = vmul.f32 %v24, %v96
    %v131 = vmul.f32 %v25, %v100
    %v132 = vmul.f32 %v26, %v100
    %v133 = vmul.f32 %v27, %v104
    %v134 = vmul.f32 %v28, %v104
    %v135 = vmul.f32 %v29, %v108
    %v136 = vmul.f32 %v30, %v108
    %v137 = vmul.f32 %v31, %v112
    %v138 = vmul.f32 %v32, %v112
    %v139 = vmul.f32 %v33, %v116
    %v140 = vmul.f32 %v34, %v116
    %vm141 = vcmask 261120
    %v142 = vsel %vm141, %v125, 0.0
    %143 = vadd.xlane.f32.xlu0 %v142
    %v144 = vpop.xlane.xlu0 %143
    %v145 = vsel %vm141, %v126, 0.0
    %146 = vadd.xlane.f32.xlu0 %v145
    %v147 = vpop.xlane.xlu0 %146
    %v148 = vsel %vm141, %v127, 0.0
    %149 = vadd.xlane.f32.xlu0 %v148
    %v150 = vpop.xlane.xlu0 %149
    %v151 = vsel %vm141, %v128, 0.0
    %152 = vadd.xlane.f32.xlu0 %v151
    %v153 = vpop.xlane.xlu0 %152
    %v154 = vsel %vm141, %v129, 0.0
    %155 = vadd.xlane.f32.xlu0 %v154
    %v156 = vpop.xlane.xlu0 %155
    %v157 = vsel %vm141, %v130, 0.0
    %158 = vadd.xlane.f32.xlu0 %v157
    %v159 = vpop.xlane.xlu0 %158
    %v160 = vsel %vm141, %v131, 0.0
    %161 = vadd.xlane.f32.xlu0 %v160
    %v162 = vpop.xlane.xlu0 %161
    %v163 = vsel %vm141, %v132, 0.0
    %164 = vadd.xlane.f32.xlu0 %v163
    %v165 = vpop.xlane.xlu0 %164
    %v166 = vsel %vm141, %v133, 0.0
    %167 = vadd.xlane.f32.xlu0 %v166
    %v168 = vpop.xlane.xlu0 %167
    %v169 = vsel %vm141, %v134, 0.0
    %170 = vadd.xlane.f32.xlu0 %v169
    %v171 = vpop.xlane.xlu0 %170
    %v172 = vsel %vm141, %v135, 0.0
    %173 = vadd.xlane.f32.xlu0 %v172
    %v174 = vpop.xlane.xlu0 %173
    %v175 = vsel %vm141, %v136, 0.0
    %176 = vadd.xlane.f32.xlu0 %v175
    %v177 = vpop.xlane.xlu0 %176
    %v178 = vsel %vm141, %v137, 0.0
    %179 = vadd.xlane.f32.xlu0 %v178
    %v180 = vpop.xlane.xlu0 %179
    %v181 = vsel %vm141, %v138, 0.0
    %182 = vadd.xlane.f32.xlu0 %v181
    %v183 = vpop.xlane.xlu0 %182
    %v184 = vsel %vm141, %v139, 0.0
    %185 = vadd.xlane.f32.xlu0 %v184
    %v186 = vpop.xlane.xlu0 %185
    %v187 = vsel %vm141, %v140, 0.0
    %188 = vadd.xlane.f32.xlu0 %v187
    %v189 = vpop.xlane.xlu0 %188
    %v190 = vlaneseq
    %v191 = vand.u32 %v190, 127
    %vm192 = vcmp.lt.s32.totalorder %v191, 8
    %v193 = vsub.f32 0.0, %v144
    %v194 = vsub.f32 0.0, %v147
    %v195 = vsub.f32 0.0, %v150
    %v196 = vsub.f32 0.0, %v153
    %v197 = vsub.f32 0.0, %v156
    %v198 = vsub.f32 0.0, %v159
    %v199 = vsub.f32 0.0, %v162
    %v200 = vsub.f32 0.0, %v165
    %v201 = vsub.f32 0.0, %v168
    %v202 = vsub.f32 0.0, %v171
    %v203 = vsub.f32 0.0, %v174
    %v204 = vsub.f32 0.0, %v177
    %v205 = vsub.f32 0.0, %v180
    %v206 = vsub.f32 0.0, %v183
    %v207 = vsub.f32 0.0, %v186
    %v208 = vsub.f32 0.0, %v189
    %v225 = vlaneseq
    %v226 = vshrl.u32 %v225, 7
    %v227 = vsub.s32 %v191, %v226
    %v228 = vrot.slane %v144, %v227
    %v229 = vadd.s32 %v191, 4294967288
    %v230 = vlaneseq
    %v231 = vshrl.u32 %v230, 7
    %v232 = vsub.s32 %v229, %v231
    %v233 = vrot.slane %v147, %v232
    %vm234 = vcmask 130112
    %v235 = vsel %vm234, %v233, %v228
    %v236 = vlaneseq
    %v237 = vshrl.u32 %v236, 7
    %v238 = vsub.s32 %v191, %v237
    %v239 = vrot.slane %v150, %v238
    %v240 = vlaneseq
    %v241 = vshrl.u32 %v240, 7
    %v242 = vsub.s32 %v229, %v241
    %v243 = vrot.slane %v153, %v242
    %v244 = vsel %vm234, %v243, %v239
    %v245 = vlaneseq
    %v246 = vshrl.u32 %v245, 7
    %v247 = vsub.s32 %v191, %v246
    %v248 = vrot.slane %v156, %v247
    %v249 = vlaneseq
    %v250 = vshrl.u32 %v249, 7
    %v251 = vsub.s32 %v229, %v250
    %v252 = vrot.slane %v159, %v251
    %v253 = vsel %vm234, %v252, %v248
    %v254 = vlaneseq
    %v255 = vshrl.u32 %v254, 7
    %v256 = vsub.s32 %v191, %v255
    %v257 = vrot.slane %v162, %v256
    %v258 = vlaneseq
    %v259 = vshrl.u32 %v258, 7
    %v260 = vsub.s32 %v229, %v259
    %v261 = vrot.slane %v165, %v260
    %v262 = vsel %vm234, %v261, %v257
    %v263 = vlaneseq
    %v264 = vshrl.u32 %v263, 7
    %v265 = vsub.s32 %v191, %v264
    %v266 = vrot.slane %v168, %v265
    %v267 = vlaneseq
    %v268 = vshrl.u32 %v267, 7
    %v269 = vsub.s32 %v229, %v268
    %v270 = vrot.slane %v171, %v269
    %v271 = vsel %vm234, %v270, %v266
    %v272 = vlaneseq
    %v273 = vshrl.u32 %v272, 7
    %v274 = vsub.s32 %v191, %v273
    %v275 = vrot.slane %v174, %v274
    %v276 = vlaneseq
    %v277 = vshrl.u32 %v276, 7
    %v278 = vsub.s32 %v229, %v277
    %v279 = vrot.slane %v177, %v278
    %v280 = vsel %vm234, %v279, %v275
    %v281 = vlaneseq
    %v282 = vshrl.u32 %v281, 7
    %v283 = vsub.s32 %v191, %v282
    %v284 = vrot.slane %v180, %v283
    %v285 = vlaneseq
    %v286 = vshrl.u32 %v285, 7
    %v287 = vsub.s32 %v229, %v286
    %v288 = vrot.slane %v183, %v287
    %v289 = vsel %vm234, %v288, %v284
    %v290 = vlaneseq
    %v291 = vshrl.u32 %v290, 7
    %v292 = vsub.s32 %v191, %v291
    %v293 = vrot.slane %v186, %v292
    %v294 = vlaneseq
    %v295 = vshrl.u32 %v294, 7
    %v296 = vsub.s32 %v229, %v295
    %v297 = vrot.slane %v189, %v296
    %v298 = vsel %vm234, %v297, %v293
    %vm299 = vcmask 1041409
    %v300 = vsel %vm299, %v244, %v235
    %vm301 = vcmask 1042434
    %v302 = vsel %vm301, %v253, %v300
    %vm303 = vcmask 1043459
    %v304 = vsel %vm303, %v262, %v302
    %vm305 = vcmask 1044484
    %v306 = vsel %vm305, %v271, %v304
    %vm307 = vcmask 1045509
    %v308 = vsel %vm307, %v280, %v306
    %vm309 = vcmask 1046534
    %v310 = vsel %vm309, %v289, %v308
    %vm311 = vcmask 1047559
    %v312 = vsel %vm311, %v298, %v310
    %v330 = vlaneseq
    %v331 = vshrl.u32 %v330, 7
    %v332 = vsub.s32 %v191, %v331
    %v333 = vrot.slane %v193, %v332
    %v334 = vlaneseq
    %v335 = vshrl.u32 %v334, 7
    %v336 = vsub.s32 %v229, %v335
    %v337 = vrot.slane %v194, %v336
    %v338 = vsel %vm234, %v337, %v333
    %v339 = vlaneseq
    %v340 = vshrl.u32 %v339, 7
    %v341 = vsub.s32 %v191, %v340
    %v342 = vrot.slane %v195, %v341
    %v343 = vlaneseq
    %v344 = vshrl.u32 %v343, 7
    %v345 = vsub.s32 %v229, %v344
    %v346 = vrot.slane %v196, %v345
    %v347 = vsel %vm234, %v346, %v342
    %v348 = vlaneseq
    %v349 = vshrl.u32 %v348, 7
    %v350 = vsub.s32 %v191, %v349
    %v351 = vrot.slane %v197, %v350
    %v352 = vlaneseq
    %v353 = vshrl.u32 %v352, 7
    %v354 = vsub.s32 %v229, %v353
    %v355 = vrot.slane %v198, %v354
    %v356 = vsel %vm234, %v355, %v351
    %v357 = vlaneseq
    %v358 = vshrl.u32 %v357, 7
    %v359 = vsub.s32 %v191, %v358
    %v360 = vrot.slane %v199, %v359
    %v361 = vlaneseq
    %v362 = vshrl.u32 %v361, 7
    %v363 = vsub.s32 %v229, %v362
    %v364 = vrot.slane %v200, %v363
    %v365 = vsel %vm234, %v364, %v360
    %v366 = vlaneseq
    %v367 = vshrl.u32 %v366, 7
    %v368 = vsub.s32 %v191, %v367
    %v369 = vrot.slane %v201, %v368
    %v370 = vlaneseq
    %v371 = vshrl.u32 %v370, 7
    %v372 = vsub.s32 %v229, %v371
    %v373 = vrot.slane %v202, %v372
    %v374 = vsel %vm234, %v373, %v369
    %v375 = vlaneseq
    %v376 = vshrl.u32 %v375, 7
    %v377 = vsub.s32 %v191, %v376
    %v378 = vrot.slane %v203, %v377
    %v379 = vlaneseq
    %v380 = vshrl.u32 %v379, 7
    %v381 = vsub.s32 %v229, %v380
    %v382 = vrot.slane %v204, %v381
    %v383 = vsel %vm234, %v382, %v378
    %v384 = vlaneseq
    %v385 = vshrl.u32 %v384, 7
    %v386 = vsub.s32 %v191, %v385
    %v387 = vrot.slane %v205, %v386
    %v388 = vlaneseq
    %v389 = vshrl.u32 %v388, 7
    %v390 = vsub.s32 %v229, %v389
    %v391 = vrot.slane %v206, %v390
    %v392 = vsel %vm234, %v391, %v387
    %v393 = vlaneseq
    %v394 = vshrl.u32 %v393, 7
    %v395 = vsub.s32 %v191, %v394
    %v396 = vrot.slane %v207, %v395
    %v397 = vlaneseq
    %v398 = vshrl.u32 %v397, 7
    %v399 = vsub.s32 %v229, %v398
    %v400 = vrot.slane %v208, %v399
    %v401 = vsel %vm234, %v400, %v396
    %v402 = vsel %vm299, %v347, %v338
    %v403 = vsel %vm301, %v356, %v402
    %v404 = vsel %vm303, %v365, %v403
    %v405 = vsel %vm305, %v374, %v404
    %v406 = vsel %vm307, %v383, %v405
    %v407 = vsel %vm309, %v392, %v406
    %v408 = vsel %vm311, %v401, %v407
    %v410 = vsel %vm192, %v312, %v408
    %v411 = vmin.f32 %v410, 0.0
    %v412 = vand.u32 2147483647, %v410
    %v413 = vsub.f32 0.0, %v412
    %v414 = vmul.f32 %v413, 1.442695
    %v415 = vpow.pop %v414
    %v416 = vadd.f32 %v415, 1.0
    %v417 = vlog2.pop %v416
    %v418 = vmul.f32 %v417, 0.6931472
    %v419 = vmul.f32 -0.5, %v415
    %v420 = vadd.f32 %v419, 1.0
    %v421 = vmul.f32 %v420, %v415
    %v422 = vand.u32 2147483647, %v415
    %vm423 = vcmp.lt.f32.partialorder %v422, 0.0004427343
    %v424 = vsel %vm423, %v421, %v418
    %v425 = vsub.f32 %v411, %v424
    %v426 = vlaneseq
    %v427 = vshrl.u32 %v426, 7
    %s428 = smul.u32 0, 8
    %v429 = vstv %s428
    %v430 = vadd.s32 %v427, %v429
    %vm431 = vcmp.lt.s32.totalorder %v430, 2
    %v432 = vsel %vm431, %v425, 0.0
    %s433 = sld [smem:[#allocation2]]
    %vm434 = vcmask 130048
    %v435 = vsel %vm434, %v432, 0.0
    %436 = vadd.xlane.f32.xlu0 %v435
    %v437 = vpop.xlane.xlu0 %436
    %v438 = vrot.slane %v437, 4
    %v439 = vadd.f32 %v437, %v438
    %v440 = vrot.slane %v439, 2
    %v441 = vadd.f32 %v439, %v440
    %v442 = vrot.slane %v441, 1
    %v443 = vadd.f32 %v441, %v442
    %s444 = vtos %v443
    %s445 = sadd.f32 %s433, %s444
    %s446 = scalar_lea.smem [#allocation2], 0
    %447 = sst [smem:[%s446]] %s445
    // Predicated region
    $region14: #{skipgram_loss.1} parent=1 // pred_check
      %p448 = pneg %p12
    $region15: #{skipgram_loss.1} parent=1 // pred_check_branch
      %450 = sbr.rel (%p448) target = $region17
    $region16: #{skipgram_loss.1} parent=1 // pred_region
      %s451 = sld [smem:[#allocation2]]
      %s452 = smul.f32 %s451, -0.0625
      %s453 = scalar_lea.smem [#allocation3], 0
      %454 = sst [smem:[%s453]] %s452
    $region17: #{skipgram_loss.1} parent=1 // pred_fallthru
      _
    // Predicated region
    $region18: #{skipgram_loss.1} parent=1 // pred_check
      _
    $region19: #{skipgram_loss.1} parent=1 // pred_check_branch
      %456 = sbr.rel (0) target = $region21
    $region20: #{skipgram_loss.1} parent=1 // pred_region
      %s458 = ssub.s32 16, 16
      %459 = vsyncadd [#allocation4], %s458
      %462 = dma.smem_to_hbm [#allocation3], 16, %s2, [#allocation4]
    $region21: #{skipgram_loss.1} parent=1 // pred_fallthru
      _
    // Predicated region
    $region22: #{skipgram_loss.1} parent=1 // pred_check
      _
    $region23: #{skipgram_loss.1} parent=1 // pred_check_branch
      %464 = sbr.rel (0) target = $region25
    $region24: #{skipgram_loss.1} parent=1 // pred_region
      %465 = dma.done [#allocation4], 16
    $region25: #{skipgram_loss.1} parent=1 // pred_fallthru
      _
    %466 = sfence
    %467 = vsyncpa [#allocation4], 1

</llo_original>
